<compile_context>
chip_gen: v6e
topology: v6e:2x2x1
jax: 0.10.0
libtpu: 0.0.40
codegen_flags: <defaults>
</compile_context>

<pallas_src>
import functools
import math

import jax
import jax.numpy as jnp
from jax import lax
from jax.experimental import pallas as pl
from jax.experimental.pallas import tpu as pltpu

LN_EPS = 1e-5  # PyTorch LayerNorm default
LANE = 128


def _round_up(a, b):
    return ((a + b - 1) // b) * b


def _layernorm(h, gamma, beta):
    # One-pass variance: mean(h*h) - mu*mu -> both XLU reductions run on the
    # same vreg data (no serial mu -> (h-mu) -> reduce dependency chain).
    mu = jnp.mean(h, axis=-1, keepdims=True)
    var = jnp.maximum(jnp.mean(h * h, axis=-1, keepdims=True) - mu * mu, 0.0)
    return (h - mu) * lax.rsqrt(var + LN_EPS) * gamma + beta


def _gelu_exact(h):
    # Matches PyTorch's default (exact, erf-based) nn.GELU.
    return 0.5 * h * (1.0 + lax.erf(h * (1.0 / math.sqrt(2.0))))


def price_head_kernel(
    x_ref,
    w1_ref, b1_ref, g1_ref, be1_ref,
    w2_ref, b2_ref, g2_ref, be2_ref,
    wh_ref, bh_ref,
    out_ref,
    *, output_dim,
):
    mm_dtype = w1_ref.dtype  # matmul operand dtype (bf16 or f32)

    # --- predictor block 1: Linear -> LayerNorm -> GELU -> Dropout(identity)
    h = jnp.dot(x_ref[...], w1_ref[...], preferred_element_type=jnp.float32)
    h = h + b1_ref[...]
    h = _gelu_exact(_layernorm(h, g1_ref[...], be1_ref[...]))

    # --- predictor block 2: Linear -> LayerNorm -> GELU -> Dropout(identity)
    h = jnp.dot(h.astype(mm_dtype), w2_ref[...], preferred_element_type=jnp.float32)
    h = h + b2_ref[...]
    h = _gelu_exact(_layernorm(h, g2_ref[...], be2_ref[...]))

    # --- fused heads: columns [0:D]=mean, [D:2D]=log_var, [2D:3D]=log_var dup
    # (duplicate lets std be computed elementwise without cross-lane moves),
    # remaining lanes are zero padding up to a lane-dense width.
    heads = jnp.dot(h.astype(mm_dtype), wh_ref[...], preferred_element_type=jnp.float32)
    heads = heads + bh_ref[...]

    clipped = jnp.clip(heads, -10.0, 10.0)
    stddev = jnp.exp(0.5 * clipped)
    lane = lax.broadcasted_iota(jnp.int32, heads.shape, 1)
    d = output_dim
    out = jnp.where(
        lane < d, heads,                       # mean (no clamp)
        jnp.where(lane < 2 * d, clipped,       # log_var (clamped)
                  jnp.where(lane < 3 * d, stddev, 0.0)))  # std
    out_ref[...] = out  # single lane-dense (unmasked) store


def price_prediction_head(x, params, *, matmul_dtype=jnp.bfloat16, tile_b=128):
    """x: [batch, input_dim] float32. params: dict (see init_params).

    matmul_dtype: jnp.bfloat16 (v6e/v7x MXU-native) or jnp.float32 (e.g. v5e
    or when exact f32 matmuls are required). All non-matmul math is f32.
    """
    batch, input_dim = x.shape
    hidden_dim = params["w1"].shape[1]
    half = params["w2"].shape[1]
    output_dim = params["wm"].shape[1]

    # --- fuse mean/log_var head weights into one lane-padded matrix.
    out_pad = max(LANE, _round_up(3 * output_dim, LANE))
    wh = jnp.zeros((half, out_pad), jnp.float32)
    wh = wh.at[:, 0:output_dim].set(params["wm"])
    wh = wh.at[:, output_dim:2 * output_dim].set(params["wv"])
    wh = wh.at[:, 2 * output_dim:3 * output_dim].set(params["wv"])  # dup for std
    bh = jnp.zeros((1, out_pad), jnp.float32)
    bh = bh.at[:, 0:output_dim].set(params["bm"])
    bh = bh.at[:, output_dim:2 * output_dim].set(params["bv"])
    bh = bh.at[:, 2 * output_dim:3 * output_dim].set(params["bv"])

    # --- matmul operands (weights + activations) in matmul_dtype; biases/LN f32.
    w1 = params["w1"].astype(matmul_dtype)
    w2 = params["w2"].astype(matmul_dtype)
    wh = wh.astype(matmul_dtype)
    xq = x.astype(matmul_dtype)

    # --- batch tiling: tile is a multiple of 8 sublanes, pad batch to tile.
    tb = min(tile_b, _round_up(batch, 8))
    padded_batch = _round_up(batch, tb)
    if padded_batch != batch:
        xq = jnp.pad(xq, ((0, padded_batch - batch), (0, 0)))
    grid = (padded_batch // tb,)

    def _tile(i):        # streamed activation tiles
        return (i, 0)

    def _resident(i):    # weights / biases / LN params: same block every step
        return (0, 0)

    in_specs = [
        pl.BlockSpec((tb, input_dim), _tile),          # x
        pl.BlockSpec((input_dim, hidden_dim), _resident),   # w1
        pl.BlockSpec((1, hidden_dim), _resident),            # b1
        pl.BlockSpec((1, hidden_dim), _resident),            # gamma1
        pl.BlockSpec((1, hidden_dim), _resident),            # beta1
        pl.BlockSpec((hidden_dim, half), _resident),          # w2
        pl.BlockSpec((1, half), _resident),                   # b2
        pl.BlockSpec((1, half), _resident),                   # gamma2
        pl.BlockSpec((1, half), _resident),                   # beta2
        pl.BlockSpec((half, out_pad), _resident),             # fused head W
        pl.BlockSpec((1, out_pad), _resident),                # fused head b
    ]
    out_specs = pl.BlockSpec((tb, out_pad), _tile)
    out_shape = jax.ShapeDtypeStruct((padded_batch, out_pad), jnp.float32)

    packed = pl.pallas_call(
        functools.partial(price_head_kernel, output_dim=output_dim),
        out_shape=out_shape,
        grid=grid,
        in_specs=in_specs,
        out_specs=out_specs,
        compiler_params=pltpu.CompilerParams(
            dimension_semantics=("parallel",),      # shard batch across TCs (v7x)
            vmem_limit_bytes=32 * 1024 * 1024,      # safe on v5e/v6e/v7x, ample headroom
        ),
    )(xq, w1, params["b1"], params["g1"], params["be1"],
      w2, params["b2"], params["g2"], params["be2"],
      wh, bh)

    mean = packed[:batch, 0:output_dim]
    log_var = packed[:batch, output_dim:2 * output_dim]
    std = packed[:batch, 2 * output_dim:3 * output_dim]
    return {"mean": mean, "log_var": log_var, "std": std}


def init_params(key, input_dim, hidden_dim, output_dim=1):
    """Deterministic synthetic parameter init (shapes match the PyTorch module)."""
    half = hidden_dim // 2
    ks = jax.random.split(key, 4)

    def lin(k, fan_in, fan_out):
        bound = 1.0 / math.sqrt(fan_in)
        kw, kb = jax.random.split(k)
        w = jax.random.uniform(kw, (fan_in, fan_out), jnp.float32, -bound, bound)
        b = jax.random.uniform(kb, (1, fan_out), jnp.float32, -bound, bound)
        return w, b

    w1, b1 = lin(ks[0], input_dim, hidden_dim)
    w2, b2 = lin(ks[1], hidden_dim, half)
    wm, bm = lin(ks[2], half, output_dim)
    wv, bv = lin(ks[3], half, output_dim)

    return {
        "w1": w1, "b1": b1,
        "g1": jnp.ones((1, hidden_dim), jnp.float32),
        "be1": jnp.zeros((1, hidden_dim), jnp.float32),
        "w2": w2, "b2": b2,
        "g2": jnp.ones((1, half), jnp.float32),
        "be2": jnp.zeros((1, half), jnp.float32),
        "wm": wm, "bm": bm,
        "wv": wv, "bv": bv,
    }


def reference_forward(x, p):
    """Pure-JAX f32 reference for sanity checking."""
    h = x @ p["w1"] + p["b1"]
    h = _gelu_exact(_layernorm(h, p["g1"], p["be1"]))
    h = h @ p["w2"] + p["b2"]
    h = _gelu_exact(_layernorm(h, p["g2"], p["be2"]))
    mean = h @ p["wm"] + p["bm"]
    log_var = jnp.clip(h @ p["wv"] + p["bv"], -10.0, 10.0)
    return {"mean": mean, "log_var": log_var, "std": jnp.exp(0.5 * log_var)}


if __name__ == "__main__":
    # Small shapes consistent with the module: batch=8, input_dim=32, hidden_dim=32.
    batch, input_dim, hidden_dim, output_dim = 8, 32, 32, 1

    key = jax.random.PRNGKey(0)
    kx, kp = jax.random.split(key)
    x = jax.random.normal(kx, (batch, input_dim), jnp.float32)
    params = init_params(kp, input_dim, hidden_dim, output_dim)
    ref = reference_forward(x, params)

    # f32 matmul path (v5e-friendly / exact): tight tolerance vs reference.
    out_f32 = price_prediction_head(x, params, matmul_dtype=jnp.float32)
    jax.block_until_ready(out_f32)
    for k in ("mean", "log_var", "std"):
        assert out_f32[k].shape == (batch, output_dim), (k, out_f32[k].shape)
        assert jnp.allclose(out_f32[k], ref[k], atol=1e-4, rtol=1e-4), k

    # bf16 matmul path (v6e/v7x MXU-native, f32 accumulate): looser tolerance.
    out_bf16 = price_prediction_head(x, params, matmul_dtype=jnp.bfloat16)
    jax.block_until_ready(out_bf16)
    for k in ("mean", "log_var", "std"):
        assert out_bf16[k].shape == (batch, output_dim), (k, out_bf16[k].shape)
        assert jnp.allclose(out_bf16[k], ref[k], atol=3e-2, rtol=3e-2), k

    # Exercise the batch grid (>1 step, padding, parallel semantics).
    batch2 = 40
    x2 = jax.random.normal(jax.random.PRNGKey(1), (batch2, input_dim), jnp.float32)
    ref2 = reference_forward(x2, params)
    out2 = price_prediction_head(x2, params, matmul_dtype=jnp.float32, tile_b=16)
    jax.block_until_ready(out2)
    for k in ("mean", "log_var", "std"):
        assert out2[k].shape == (batch2, output_dim), (k, out2[k].shape)
        assert jnp.allclose(out2[k], ref2[k], atol=1e-4, rtol=1e-4), k

    # TODO(synk): Dropout layers are identity here (eval mode); training-mode
    # stochastic dropout would use pltpu.prng_seed + pltpu.stateful_bernoulli.
    print("KERNEL_OK")
</pallas_src>

<mosaic_0001>
module attributes {stable_mosaic.version = 11 : i64} {
  func.func @price_head_kernel(%arg0: i32, %arg1: memref<8x32xf32, #tpu.memory_space<vmem>>, %arg2: memref<32x32xf32, #tpu.memory_space<vmem>>, %arg3: memref<1x32xf32, #tpu.memory_space<vmem>>, %arg4: memref<1x32xf32, #tpu.memory_space<vmem>>, %arg5: memref<1x32xf32, #tpu.memory_space<vmem>>, %arg6: memref<32x16xf32, #tpu.memory_space<vmem>>, %arg7: memref<1x16xf32, #tpu.memory_space<vmem>>, %arg8: memref<1x16xf32, #tpu.memory_space<vmem>>, %arg9: memref<1x16xf32, #tpu.memory_space<vmem>>, %arg10: memref<16x128xf32, #tpu.memory_space<vmem>>, %arg11: memref<1x128xf32, #tpu.memory_space<vmem>>, %arg12: memref<8x128xf32, #tpu.memory_space<vmem>>) attributes {dimension_semantics = [#tpu.dimension_semantics<parallel>], iteration_bounds = array<i64: 1>, scalar_prefetch = 0 : i64, scratch_operands = 0 : i64, tpu.core_type = #tpu.core_type<tc>, window_params = [{transform_indices = @transform_0, window_bounds = array<i64: 8, 32>}, {pipeline_mode = #tpu.pipeline_mode<synchronous>, transform_indices = @transform_1, window_bounds = array<i64: 32, 32>}, {pipeline_mode = #tpu.pipeline_mode<synchronous>, transform_indices = @transform_2, window_bounds = array<i64: 1, 32>}, {pipeline_mode = #tpu.pipeline_mode<synchronous>, transform_indices = @transform_3, window_bounds = array<i64: 1, 32>}, {pipeline_mode = #tpu.pipeline_mode<synchronous>, transform_indices = @transform_4, window_bounds = array<i64: 1, 32>}, {pipeline_mode = #tpu.pipeline_mode<synchronous>, transform_indices = @transform_5, window_bounds = array<i64: 32, 16>}, {pipeline_mode = #tpu.pipeline_mode<synchronous>, transform_indices = @transform_6, window_bounds = array<i64: 1, 16>}, {pipeline_mode = #tpu.pipeline_mode<synchronous>, transform_indices = @transform_7, window_bounds = array<i64: 1, 16>}, {pipeline_mode = #tpu.pipeline_mode<synchronous>, transform_indices = @transform_8, window_bounds = array<i64: 1, 16>}, {pipeline_mode = #tpu.pipeline_mode<synchronous>, transform_indices = @transform_9, window_bounds = array<i64: 16, 128>}, {pipeline_mode = #tpu.pipeline_mode<synchronous>, transform_indices = @transform_10, window_bounds = array<i64: 1, 128>}, {transform_indices = @transform_11, window_bounds = array<i64: 8, 128>}]} {
    %c0 = arith.constant 0 : index
    %c0_0 = arith.constant 0 : index
    %0 = vector.load %arg1[%c0, %c0_0] : memref<8x32xf32, #tpu.memory_space<vmem>>, vector<8x32xf32>
    %c0_1 = arith.constant 0 : index
    %c0_2 = arith.constant 0 : index
    %1 = vector.load %arg2[%c0_1, %c0_2] : memref<32x32xf32, #tpu.memory_space<vmem>>, vector<32x32xf32>
    %cst = arith.constant dense<0.000000e+00> : vector<8x32xf32>
    %2 = tpu.matmul %0, %1, %cst {dimension_numbers = #tpu.dot_dimension_numbers<[1], [0], [0], [1], [0, 0, 1, 1], [], []>} : vector<8x32xf32>, vector<32x32xf32>, vector<8x32xf32> -> vector<8x32xf32>
    %c0_3 = arith.constant 0 : index
    %c0_4 = arith.constant 0 : index
    %3 = vector.load %arg3[%c0_3, %c0_4] : memref<1x32xf32, #tpu.memory_space<vmem>>, vector<1x32xf32>
    %4 = vector.broadcast %3 : vector<1x32xf32> to vector<8x32xf32>
    %5 = arith.addf %2, %4 : vector<8x32xf32>
    %c0_5 = arith.constant 0 : index
    %c0_6 = arith.constant 0 : index
    %6 = vector.load %arg4[%c0_5, %c0_6] : memref<1x32xf32, #tpu.memory_space<vmem>>, vector<1x32xf32>
    %c0_7 = arith.constant 0 : index
    %c0_8 = arith.constant 0 : index
    %7 = vector.load %arg5[%c0_7, %c0_8] : memref<1x32xf32, #tpu.memory_space<vmem>>, vector<1x32xf32>
    %cst_9 = arith.constant dense<0.000000e+00> : vector<8xf32>
    %8 = vector.multi_reduction <add>, %5, %cst_9 [1] : vector<8x32xf32> to vector<8xf32>
    %9 = vector.shape_cast %8 : vector<8xf32> to vector<8x1xf32>
    %cst_10 = arith.constant 3.200000e+01 : f32
    %10 = vector.broadcast %cst_10 : f32 to vector<8x1xf32>
    %11 = arith.divf %9, %10 : vector<8x1xf32>
    %12 = arith.mulf %5, %5 : vector<8x32xf32>
    %cst_11 = arith.constant dense<0.000000e+00> : vector<8xf32>
    %13 = vector.multi_reduction <add>, %12, %cst_11 [1] : vector<8x32xf32> to vector<8xf32>
    %14 = vector.shape_cast %13 : vector<8xf32> to vector<8x1xf32>
    %cst_12 = arith.constant 3.200000e+01 : f32
    %15 = vector.broadcast %cst_12 : f32 to vector<8x1xf32>
    %16 = arith.divf %14, %15 : vector<8x1xf32>
    %17 = arith.mulf %11, %11 : vector<8x1xf32>
    %18 = arith.subf %16, %17 : vector<8x1xf32>
    %cst_13 = arith.constant 0.000000e+00 : f32
    %19 = vector.broadcast %cst_13 : f32 to vector<8x1xf32>
    %20 = arith.maximumf %18, %19 : vector<8x1xf32>
    %21 = vector.broadcast %11 : vector<8x1xf32> to vector<8x32xf32>
    %22 = arith.subf %5, %21 : vector<8x32xf32>
    %cst_14 = arith.constant 9.99999974E-6 : f32
    %23 = vector.broadcast %cst_14 : f32 to vector<8x1xf32>
    %24 = arith.addf %20, %23 : vector<8x1xf32>
    %25 = math.rsqrt %24 : vector<8x1xf32>
    %26 = vector.broadcast %25 : vector<8x1xf32> to vector<8x32xf32>
    %27 = arith.mulf %22, %26 : vector<8x32xf32>
    %28 = vector.broadcast %6 : vector<1x32xf32> to vector<8x32xf32>
    %29 = arith.mulf %27, %28 : vector<8x32xf32>
    %30 = vector.broadcast %7 : vector<1x32xf32> to vector<8x32xf32>
    %31 = arith.addf %29, %30 : vector<8x32xf32>
    %cst_15 = arith.constant 5.000000e-01 : f32
    %32 = vector.broadcast %cst_15 : f32 to vector<8x32xf32>
    %33 = arith.mulf %32, %31 : vector<8x32xf32>
    %cst_16 = arith.constant 0.707106769 : f32
    %34 = vector.broadcast %cst_16 : f32 to vector<8x32xf32>
    %35 = arith.mulf %31, %34 : vector<8x32xf32>
    %36 = math.erf %35 : vector<8x32xf32>
    %cst_17 = arith.constant 1.000000e+00 : f32
    %37 = vector.broadcast %cst_17 : f32 to vector<8x32xf32>
    %38 = arith.addf %37, %36 : vector<8x32xf32>
    %39 = arith.mulf %33, %38 : vector<8x32xf32>
    %c0_18 = arith.constant 0 : index
    %c0_19 = arith.constant 0 : index
    %40 = vector.load %arg6[%c0_18, %c0_19] : memref<32x16xf32, #tpu.memory_space<vmem>>, vector<32x16xf32>
    %cst_20 = arith.constant dense<0.000000e+00> : vector<8x16xf32>
    %41 = tpu.matmul %39, %40, %cst_20 {dimension_numbers = #tpu.dot_dimension_numbers<[1], [0], [0], [1], [0, 0, 1, 1], [], []>} : vector<8x32xf32>, vector<32x16xf32>, vector<8x16xf32> -> vector<8x16xf32>
    %c0_21 = arith.constant 0 : index
    %c0_22 = arith.constant 0 : index
    %42 = vector.load %arg7[%c0_21, %c0_22] : memref<1x16xf32, #tpu.memory_space<vmem>>, vector<1x16xf32>
    %43 = vector.broadcast %42 : vector<1x16xf32> to vector<8x16xf32>
    %44 = arith.addf %41, %43 : vector<8x16xf32>
    %c0_23 = arith.constant 0 : index
    %c0_24 = arith.constant 0 : index
    %45 = vector.load %arg8[%c0_23, %c0_24] : memref<1x16xf32, #tpu.memory_space<vmem>>, vector<1x16xf32>
    %c0_25 = arith.constant 0 : index
    %c0_26 = arith.constant 0 : index
    %46 = vector.load %arg9[%c0_25, %c0_26] : memref<1x16xf32, #tpu.memory_space<vmem>>, vector<1x16xf32>
    %cst_27 = arith.constant dense<0.000000e+00> : vector<8xf32>
    %47 = vector.multi_reduction <add>, %44, %cst_27 [1] : vector<8x16xf32> to vector<8xf32>
    %48 = vector.shape_cast %47 : vector<8xf32> to vector<8x1xf32>
    %cst_28 = arith.constant 1.600000e+01 : f32
    %49 = vector.broadcast %cst_28 : f32 to vector<8x1xf32>
    %50 = arith.divf %48, %49 : vector<8x1xf32>
    %51 = arith.mulf %44, %44 : vector<8x16xf32>
    %cst_29 = arith.constant dense<0.000000e+00> : vector<8xf32>
    %52 = vector.multi_reduction <add>, %51, %cst_29 [1] : vector<8x16xf32> to vector<8xf32>
    %53 = vector.shape_cast %52 : vector<8xf32> to vector<8x1xf32>
    %cst_30 = arith.constant 1.600000e+01 : f32
    %54 = vector.broadcast %cst_30 : f32 to vector<8x1xf32>
    %55 = arith.divf %53, %54 : vector<8x1xf32>
    %56 = arith.mulf %50, %50 : vector<8x1xf32>
    %57 = arith.subf %55, %56 : vector<8x1xf32>
    %cst_31 = arith.constant 0.000000e+00 : f32
    %58 = vector.broadcast %cst_31 : f32 to vector<8x1xf32>
    %59 = arith.maximumf %57, %58 : vector<8x1xf32>
    %60 = vector.broadcast %50 : vector<8x1xf32> to vector<8x16xf32>
    %61 = arith.subf %44, %60 : vector<8x16xf32>
    %cst_32 = arith.constant 9.99999974E-6 : f32
    %62 = vector.broadcast %cst_32 : f32 to vector<8x1xf32>
    %63 = arith.addf %59, %62 : vector<8x1xf32>
    %64 = math.rsqrt %63 : vector<8x1xf32>
    %65 = vector.broadcast %64 : vector<8x1xf32> to vector<8x16xf32>
    %66 = arith.mulf %61, %65 : vector<8x16xf32>
    %67 = vector.broadcast %45 : vector<1x16xf32> to vector<8x16xf32>
    %68 = arith.mulf %66, %67 : vector<8x16xf32>
    %69 = vector.broadcast %46 : vector<1x16xf32> to vector<8x16xf32>
    %70 = arith.addf %68, %69 : vector<8x16xf32>
    %cst_33 = arith.constant 5.000000e-01 : f32
    %71 = vector.broadcast %cst_33 : f32 to vector<8x16xf32>
    %72 = arith.mulf %71, %70 : vector<8x16xf32>
    %cst_34 = arith.constant 0.707106769 : f32
    %73 = vector.broadcast %cst_34 : f32 to vector<8x16xf32>
    %74 = arith.mulf %70, %73 : vector<8x16xf32>
    %75 = math.erf %74 : vector<8x16xf32>
    %cst_35 = arith.constant 1.000000e+00 : f32
    %76 = vector.broadcast %cst_35 : f32 to vector<8x16xf32>
    %77 = arith.addf %76, %75 : vector<8x16xf32>
    %78 = arith.mulf %72, %77 : vector<8x16xf32>
    %c0_36 = arith.constant 0 : index
    %c0_37 = arith.constant 0 : index
    %79 = vector.load %arg10[%c0_36, %c0_37] : memref<16x128xf32, #tpu.memory_space<vmem>>, vector<16x128xf32>
    %cst_38 = arith.constant dense<0.000000e+00> : vector<8x128xf32>
    %80 = tpu.matmul %78, %79, %cst_38 {dimension_numbers = #tpu.dot_dimension_numbers<[1], [0], [0], [1], [0, 0, 1, 1], [], []>} : vector<8x16xf32>, vector<16x128xf32>, vector<8x128xf32> -> vector<8x128xf32>
    %c0_39 = arith.constant 0 : index
    %c0_40 = arith.constant 0 : index
    %81 = vector.load %arg11[%c0_39, %c0_40] : memref<1x128xf32, #tpu.memory_space<vmem>>, vector<1x128xf32>
    %82 = vector.broadcast %81 : vector<1x128xf32> to vector<8x128xf32>
    %83 = arith.addf %80, %82 : vector<8x128xf32>
    %cst_41 = arith.constant -1.000000e+01 : f32
    %cst_42 = arith.constant 1.000000e+01 : f32
    %84 = vector.broadcast %cst_41 : f32 to vector<8x128xf32>
    %85 = arith.maximumf %84, %83 : vector<8x128xf32>
    %86 = vector.broadcast %cst_42 : f32 to vector<8x128xf32>
    %87 = arith.minimumf %86, %85 : vector<8x128xf32>
    %cst_43 = arith.constant 5.000000e-01 : f32
    %88 = vector.broadcast %cst_43 : f32 to vector<8x128xf32>
    %89 = arith.mulf %88, %87 : vector<8x128xf32>
    %90 = math.exp %89 : vector<8x128xf32>
    %91 = tpu.iota {dimensions = array<i32: 1>} : vector<8x128xi32>
    %c1_i32 = arith.constant 1 : i32
    %92 = vector.broadcast %c1_i32 : i32 to vector<8x128xi32>
    %93 = arith.cmpi slt, %91, %92 : vector<8x128xi32>
    %c2_i32 = arith.constant 2 : i32
    %94 = vector.broadcast %c2_i32 : i32 to vector<8x128xi32>
    %95 = arith.cmpi slt, %91, %94 : vector<8x128xi32>
    %c3_i32 = arith.constant 3 : i32
    %96 = vector.broadcast %c3_i32 : i32 to vector<8x128xi32>
    %97 = arith.cmpi slt, %91, %96 : vector<8x128xi32>
    %cst_44 = arith.constant 0.000000e+00 : f32
    %98 = vector.broadcast %cst_44 : f32 to vector<8x128xf32>
    %99 = arith.select %97, %90, %98 : vector<8x128xi1>, vector<8x128xf32>
    %100 = arith.select %95, %87, %99 : vector<8x128xi1>, vector<8x128xf32>
    %101 = arith.select %93, %83, %100 : vector<8x128xi1>, vector<8x128xf32>
    %c0_45 = arith.constant 0 : index
    %c0_46 = arith.constant 0 : index
    %102 = vector.load %arg12[%c0_45, %c0_46] : memref<8x128xf32, #tpu.memory_space<vmem>>, vector<8x128xf32>
    tpu.vector_store %arg12[%c0_45, %c0_46], %101 {strides = array<i32>} : memref<8x128xf32, #tpu.memory_space<vmem>>, vector<8x128xf32>,
    return
  }
  func.func @transform_0(%arg0: i32) -> (i32, i32) {
    %c0_i32 = arith.constant 0 : i32
    %c0_i32_0 = arith.constant 0 : i32
    return %arg0, %c0_i32 : i32, i32
  }
  func.func @transform_1(%arg0: i32) -> (i32, i32) {
    %c0_i32 = arith.constant 0 : i32
    %c0_i32_0 = arith.constant 0 : i32
    %c0_i32_1 = arith.constant 0 : i32
    return %c0_i32, %c0_i32_0 : i32, i32
  }
  func.func @transform_2(%arg0: i32) -> (i32, i32) {
    %c0_i32 = arith.constant 0 : i32
    %c0_i32_0 = arith.constant 0 : i32
    %c0_i32_1 = arith.constant 0 : i32
    return %c0_i32, %c0_i32_0 : i32, i32
  }
  func.func @transform_3(%arg0: i32) -> (i32, i32) {
    %c0_i32 = arith.constant 0 : i32
    %c0_i32_0 = arith.constant 0 : i32
    %c0_i32_1 = arith.constant 0 : i32
    return %c0_i32, %c0_i32_0 : i32, i32
  }
  func.func @transform_4(%arg0: i32) -> (i32, i32) {
    %c0_i32 = arith.constant 0 : i32
    %c0_i32_0 = arith.constant 0 : i32
    %c0_i32_1 = arith.constant 0 : i32
    return %c0_i32, %c0_i32_0 : i32, i32
  }
  func.func @transform_5(%arg0: i32) -> (i32, i32) {
    %c0_i32 = arith.constant 0 : i32
    %c0_i32_0 = arith.constant 0 : i32
    %c0_i32_1 = arith.constant 0 : i32
    return %c0_i32, %c0_i32_0 : i32, i32
  }
  func.func @transform_6(%arg0: i32) -> (i32, i32) {
    %c0_i32 = arith.constant 0 : i32
    %c0_i32_0 = arith.constant 0 : i32
    %c0_i32_1 = arith.constant 0 : i32
    return %c0_i32, %c0_i32_0 : i32, i32
  }
  func.func @transform_7(%arg0: i32) -> (i32, i32) {
    %c0_i32 = arith.constant 0 : i32
    %c0_i32_0 = arith.constant 0 : i32
    %c0_i32_1 = arith.constant 0 : i32
    return %c0_i32, %c0_i32_0 : i32, i32
  }
  func.func @transform_8(%arg0: i32) -> (i32, i32) {
    %c0_i32 = arith.constant 0 : i32
    %c0_i32_0 = arith.constant 0 : i32
    %c0_i32_1 = arith.constant 0 : i32
    return %c0_i32, %c0_i32_0 : i32, i32
  }
  func.func @transform_9(%arg0: i32) -> (i32, i32) {
    %c0_i32 = arith.constant 0 : i32
    %c0_i32_0 = arith.constant 0 : i32
    %c0_i32_1 = arith.constant 0 : i32
    return %c0_i32, %c0_i32_0 : i32, i32
  }
  func.func @transform_10(%arg0: i32) -> (i32, i32) {
    %c0_i32 = arith.constant 0 : i32
    %c0_i32_0 = arith.constant 0 : i32
    %c0_i32_1 = arith.constant 0 : i32
    return %c0_i32, %c0_i32_0 : i32, i32
  }
  func.func @transform_11(%arg0: i32) -> (i32, i32) {
    %c0_i32 = arith.constant 0 : i32
    %c0_i32_0 = arith.constant 0 : i32
    return %arg0, %c0_i32 : i32, i32
  }
}

</mosaic_0001>

<llo_original>
// kernel: tpu_custom_call.1
$region0: #{tpu_custom_call.1}
  #allocation0 [shape = 'u32[]', space=smem, size = 0x4, offset = 0x4, fixed_abs, tag = 'smem constant byte address 0x4 - core index']
  #allocation1 [shape = 'u32[144,128]{1,0:T(1,128)}', space=vmem, size = 0x12000, scoped, tag = 'internal scratch']
  %s0 = inlined_call_operand.hbm [shape: f32[8,32], index: 0, kind: input, shape index: {}]
  %s1 = inlined_call_operand.vmem [shape: f32[32,32], index: 1, kind: input, shape index: {}]
  %s2 = inlined_call_operand.vmem [shape: f32[1,32], index: 2, kind: input, shape index: {}]
  %s3 = inlined_call_operand.vmem [shape: f32[1,32], index: 3, kind: input, shape index: {}]
  %s4 = inlined_call_operand.vmem [shape: f32[1,32], index: 4, kind: input, shape index: {}]
  %s5 = inlined_call_operand.vmem [shape: f32[32,16], index: 5, kind: input, shape index: {}]
  %s6 = inlined_call_operand.vmem [shape: f32[1,16], index: 6, kind: input, shape index: {}]
  %s7 = inlined_call_operand.vmem [shape: f32[1,16], index: 7, kind: input, shape index: {}]
  %s8 = inlined_call_operand.vmem [shape: f32[1,16], index: 8, kind: input, shape index: {}]
  %s9 = inlined_call_operand.vmem [shape: f32[16,128], index: 9, kind: input, shape index: {}]
  %s10 = inlined_call_operand.vmem [shape: f32[1,128], index: 10, kind: input, shape index: {}]
  %s11 = inlined_call_operand.hbm [shape: f32[8,128], index: 11, kind: output, shape index: {}]
  %s12 = sld [smem:[#allocation0]]
  $region58: #{tpu_custom_call.1} parent=0
    _
  %s14 = ssub.s32 1, %s12
  %s15 = scalar_select 0, %s14, %s12
  $region1: #{tpu_custom_call.1} parent=0
    #allocation2 [shape = 'u8[4096]{0}', space=vmem, size = 0x1000, scoped, tag = 'input window, operand 0, single buffered']
    #allocation3 [shape = 's32[1]{0}', space=sflag, size = 0x4, scoped, tag = 'scoped memory for tpu_custom_call.1']
    #allocation4 [shape = 's32[1]{0}', space=sflag, size = 0x4, scoped, tag = 'scoped memory for tpu_custom_call.1']
    #allocation5 [shape = 'u8[4096]{0}', space=vmem, size = 0x1000, scoped, tag = 'output window, operand 0, single buffered']
    %16 = vsyncpa [#allocation3], 0
    %17 = vsyncpa [#allocation4], 0
    // Predicated region
    $region2: #{tpu_custom_call.1} parent=1 // pred_check
      _
    $region3: #{tpu_custom_call.1} parent=1 // pred_check_branch
      %19 = sbr.rel (0) target = $region5
    $region4: #{tpu_custom_call.1} parent=1 // pred_region
      %s21 = ssub.s32 128, 128
      %22 = vsyncadd [#allocation3], %s21
      %s24 = sshll.u32 [#allocation2], 4
      %s25 = int_to_ptr.vmem [resolvable:$true] %s24
      %27 = dma.hbm_to_vmem [thread:$0]  %s0, 128, %s25, [#allocation3]
    $region5: #{tpu_custom_call.1} parent=1 // pred_fallthru
      _
    // Predicated region
    $region6: #{tpu_custom_call.1} parent=1 // pred_check
      _
    $region7: #{tpu_custom_call.1} parent=1 // pred_check_branch
      %29 = sbr.rel (0) target = $region9
    $region8: #{tpu_custom_call.1} parent=1 // pred_region
      _
    $region9: #{tpu_custom_call.1} parent=1 // pred_fallthru
      _
    // Predicated region
    $region10: #{tpu_custom_call.1} parent=1 // pred_check
      _
    $region11: #{tpu_custom_call.1} parent=1 // pred_check_branch
      %31 = sbr.rel (0) target = $region13
    $region12: #{tpu_custom_call.1} parent=1 // pred_region
      _
    $region13: #{tpu_custom_call.1} parent=1 // pred_fallthru
      _
    // Predicated region
    $region14: #{tpu_custom_call.1} parent=1 // pred_check
      _
    $region15: #{tpu_custom_call.1} parent=1 // pred_check_branch
      %33 = sbr.rel (0) target = $region17
    $region16: #{tpu_custom_call.1} parent=1 // pred_region
      _
    $region17: #{tpu_custom_call.1} parent=1 // pred_fallthru
      _
    // Predicated region
    $region18: #{tpu_custom_call.1} parent=1 // pred_check
      _
    $region19: #{tpu_custom_call.1} parent=1 // pred_check_branch
      %35 = sbr.rel (0) target = $region21
    $region20: #{tpu_custom_call.1} parent=1 // pred_region
      _
    $region21: #{tpu_custom_call.1} parent=1 // pred_fallthru
      _
    // Predicated region
    $region22: #{tpu_custom_call.1} parent=1 // pred_check
      _
    $region23: #{tpu_custom_call.1} parent=1 // pred_check_branch
      %37 = sbr.rel (0) target = $region25
    $region24: #{tpu_custom_call.1} parent=1 // pred_region
      _
    $region25: #{tpu_custom_call.1} parent=1 // pred_fallthru
      _
    // Predicated region
    $region26: #{tpu_custom_call.1} parent=1 // pred_check
      _
    $region27: #{tpu_custom_call.1} parent=1 // pred_check_branch
      %39 = sbr.rel (0) target = $region29
    $region28: #{tpu_custom_call.1} parent=1 // pred_region
      _
    $region29: #{tpu_custom_call.1} parent=1 // pred_fallthru
      _
    // Predicated region
    $region30: #{tpu_custom_call.1} parent=1 // pred_check
      _
    $region31: #{tpu_custom_call.1} parent=1 // pred_check_branch
      %41 = sbr.rel (0) target = $region33
    $region32: #{tpu_custom_call.1} parent=1 // pred_region
      _
    $region33: #{tpu_custom_call.1} parent=1 // pred_fallthru
      _
    // Predicated region
    $region34: #{tpu_custom_call.1} parent=1 // pred_check
      _
    $region35: #{tpu_custom_call.1} parent=1 // pred_check_branch
      %43 = sbr.rel (0) target = $region37
    $region36: #{tpu_custom_call.1} parent=1 // pred_region
      _
    $region37: #{tpu_custom_call.1} parent=1 // pred_fallthru
      _
    // Predicated region
    $region38: #{tpu_custom_call.1} parent=1 // pred_check
      _
    $region39: #{tpu_custom_call.1} parent=1 // pred_check_branch
      %45 = sbr.rel (0) target = $region41
    $region40: #{tpu_custom_call.1} parent=1 // pred_region
      _
    $region41: #{tpu_custom_call.1} parent=1 // pred_fallthru
      _
    // Predicated region
    $region42: #{tpu_custom_call.1} parent=1 // pred_check
      _
    $region43: #{tpu_custom_call.1} parent=1 // pred_check_branch
      %47 = sbr.rel (0) target = $region45
    $region44: #{tpu_custom_call.1} parent=1 // pred_region
      _
    $region45: #{tpu_custom_call.1} parent=1 // pred_fallthru
      _
    // Predicated region
    $region46: #{tpu_custom_call.1} parent=1 // pred_check
      _
    $region47: #{tpu_custom_call.1} parent=1 // pred_check_branch
      %49 = sbr.rel (0) target = $region49
    $region48: #{tpu_custom_call.1} parent=1 // pred_region
      %50 = dma.done [#allocation3], 128
    $region49: #{tpu_custom_call.1} parent=1 // pred_fallthru
      _
    %v51 = vld [vmem:[#allocation2] sm:$0xff]
    %v52 = vld [vmem:[%s1] sm:$0xff]
    %v53 = vld [vmem:[%s1 + $0x8] sm:$0xff]
    %v54 = vld [vmem:[%s1 + $0x10] sm:$0xff]
    %v55 = vld [vmem:[%s1 + $0x18] sm:$0xff]
    %v56 = vld [vmem:[%s2] sm:$0x1]
    %v58 = vlaneseq
    %v59 = vshrl.u32 %v58, 7
    %v60 = vsub.s32 0, %v59
    %v61 = vrot.slane %v56, %v60
    %vm63 = vcmask 261120
    %v65 = vsel %vm63, %v51, 0
    %67 = vmatprep.subr.mxu0 0.0
    %68 = vmatpush1.msra.mxu0 0.0
    %69 = vmatprep.subr.mxu0 0.0
    %70 = vmatpush1.msra.mxu0 0.0
    %71 = vmatprep.subr.mxu0 0.0
    %72 = vmatpush1.msra.mxu0 0.0
    %73 = vmatprep.subr.mxu0 0.0
    %74 = vmatpush1.msra.mxu0 0.0
    %75 = vmatprep.subr.mxu0 0.0
    %76 = vmatpush1.msra.mxu0 0.0
    %77 = vmatprep.subr.mxu0 0.0
    %78 = vmatpush1.msra.mxu0 0.0
    %79 = vmatprep.subr.mxu0 0.0
    %80 = vmatpush1.msra.mxu0 0.0
    %81 = vmatprep.subr.mxu0 0.0
    %82 = vmatpush1.msra.mxu0 0.0
    %83 = vmatprep.subr.mxu0 0.0
    %84 = vmatpush1.msra.mxu0 0.0
    %85 = vmatprep.subr.mxu0 0.0
    %86 = vmatpush1.msra.mxu0 0.0
    %87 = vmatprep.subr.mxu0 0.0
    %88 = vmatpush1.msra.mxu0 0.0
    %89 = vmatprep.subr.mxu0 0.0
    %90 = vmatpush1.msra.mxu0 0.0
    %91 = vmatprep.subr.mxu0 0.0
    %92 = vmatpush1.msra.mxu0 %v55
    %93 = vmatprep.subr.mxu0 0.0
    %94 = vmatpush1.msra.mxu0 %v54
    %95 = vmatprep.subr.mxu0 0.0
    %96 = vmatpush1.msra.mxu0 %v53
    %97 = vmatprep.subr.mxu0 0.0
    %98 = vmatpush1.msra.mxu0 %v52
    %99 = vmatprep.subr.mxu0 0.0
    %100 = vmatpush2.msra.mxu0 0.0
    %101 = vmatprep.subr.mxu0 0.0
    %102 = vmatpush2.msra.mxu0 0.0
    %103 = vmatprep.subr.mxu0 0.0
    %104 = vmatpush2.msra.mxu0 0.0
    %105 = vmatprep.subr.mxu0 0.0
    %106 = vmatpush2.msra.mxu0 0.0
    %107 = vmatprep.subr.mxu0 0.0
    %108 = vmatpush2.msra.mxu0 0.0
    %109 = vmatprep.subr.mxu0 0.0
    %110 = vmatpush2.msra.mxu0 0.0
    %111 = vmatprep.subr.mxu0 0.0
    %112 = vmatpush2.msra.mxu0 0.0
    %113 = vmatprep.subr.mxu0 0.0
    %114 = vmatpush2.msra.mxu0 0.0
    %115 = vmatprep.subr.mxu0 0.0
    %116 = vmatpush2.msra.mxu0 0.0
    %117 = vmatprep.subr.mxu0 0.0
    %118 = vmatpush2.msra.mxu0 0.0
    %119 = vmatprep.subr.mxu0 0.0
    %120 = vmatpush2.msra.mxu0 0.0
    %121 = vmatprep.subr.mxu0 0.0
    %122 = vmatpush2.msra.mxu0 0.0
    %123 = vmatprep.subr.mxu0 0.0
    %124 = vmatpush2.msra.mxu0 0.0
    %125 = vmatprep.subr.mxu0 0.0
    %126 = vmatpush2.msra.mxu0 0.0
    %127 = vmatprep.subr.mxu0 0.0
    %128 = vmatpush2.msra.mxu0 0.0
    %129 = vmatprep.subr.mxu0 0.0
    %130 = vmatpush2.msra.mxu0 0.0
    %131 = vmatprep.mubr.f32.mxu0 0.0
    %132 = vmatmul.mubr.f32.gmra.mxu0 %v65
    %v133 = vpop.f32.mrf.mxu0
    %v134 = vadd.f32 %v61, %v133
    %v135 = vpop.f32.mrf.mxu0
    %136 = vdwg.mxu0
    %v137 = vld [vmem:[%s3] sm:$0x1]
    %v138 = vld [vmem:[%s4] sm:$0x1]
    %v139 = vsel %vm63, %v134, 0.0
    %140 = vadd.xlane.f32.xlu0 %v139
    %v141 = vpop.xlane.xlu0 %140
    %v142 = vrcp.pop 32.0
    %v143 = vmul.f32 %v141, %v142
    %v144 = vmul.f32 %v134, %v134
    %v145 = vsel %vm63, %v144, 0.0
    %146 = vadd.xlane.f32.xlu0 %v145
    %v147 = vpop.xlane.xlu0 %146
    %v148 = vmul.f32 %v147, %v142
    %v149 = vmul.f32 %v143, %v143
    %v150 = vsub.f32 %v148, %v149
    %v151 = vmax.f32 %v150, 0.0
    %v152 = vsub.f32 %v134, %v143
    %v153 = vadd.f32 %v151, 1e-05
    %v154 = vrsqrt.pop %v153
    %v155 = vmul.f32 %v152, %v154
    %v157 = vlaneseq
    %v158 = vshrl.u32 %v157, 7
    %v159 = vsub.s32 0, %v158
    %v160 = vrot.slane %v137, %v159
    %v162 = vmul.f32 %v155, %v160
    %v164 = vlaneseq
    %v165 = vshrl.u32 %v164, 7
    %v166 = vsub.s32 0, %v165
    %v167 = vrot.slane %v138, %v166
    %v169 = vadd.f32 %v162, %v167
    %v170 = vmul.f32 %v169, 0.5
    %v171 = vmul.f32 %v169, 0.70710677
    %v172 = verf.f32.pop %v171
    %v173 = vadd.f32 %v172, 1.0
    %v174 = vmul.f32 %v170, %v173
    %v175 = vld [vmem:[%s5] sm:$0xff]
    %v176 = vld [vmem:[%s5 + $0x8] sm:$0xff]
    %v177 = vld [vmem:[%s5 + $0x10] sm:$0xff]
    %v178 = vld [vmem:[%s5 + $0x18] sm:$0xff]
    %v179 = vld [vmem:[%s6] sm:$0x1]
    %v181 = vlaneseq
    %v182 = vshrl.u32 %v181, 7
    %v183 = vsub.s32 0, %v182
    %v184 = vrot.slane %v179, %v183
    %v187 = vsel %vm63, %v174, 0
    %189 = vmatprep.subr.mxu0 0.0
    %190 = vmatpush1.msra.mxu0 0.0
    %191 = vmatprep.subr.mxu0 0.0
    %192 = vmatpush1.msra.mxu0 0.0
    %193 = vmatprep.subr.mxu0 0.0
    %194 = vmatpush1.msra.mxu0 0.0
    %195 = vmatprep.subr.mxu0 0.0
    %196 = vmatpush1.msra.mxu0 0.0
    %197 = vmatprep.subr.mxu0 0.0
    %198 = vmatpush1.msra.mxu0 0.0
    %199 = vmatprep.subr.mxu0 0.0
    %200 = vmatpush1.msra.mxu0 0.0
    %201 = vmatprep.subr.mxu0 0.0
    %202 = vmatpush1.msra.mxu0 0.0
    %203 = vmatprep.subr.mxu0 0.0
    %204 = vmatpush1.msra.mxu0 0.0
    %205 = vmatprep.subr.mxu0 0.0
    %206 = vmatpush1.msra.mxu0 0.0
    %207 = vmatprep.subr.mxu0 0.0
    %208 = vmatpush1.msra.mxu0 0.0
    %209 = vmatprep.subr.mxu0 0.0
    %210 = vmatpush1.msra.mxu0 0.0
    %211 = vmatprep.subr.mxu0 0.0
    %212 = vmatpush1.msra.mxu0 0.0
    %213 = vmatprep.subr.mxu0 0.0
    %214 = vmatpush1.msra.mxu0 %v178
    %215 = vmatprep.subr.mxu0 0.0
    %216 = vmatpush1.msra.mxu0 %v177
    %217 = vmatprep.subr.mxu0 0.0
    %218 = vmatpush1.msra.mxu0 %v176
    %219 = vmatprep.subr.mxu0 0.0
    %220 = vmatpush1.msra.mxu0 %v175
    %221 = vmatprep.subr.mxu0 0.0
    %222 = vmatpush2.msra.mxu0 0.0
    %223 = vmatprep.subr.mxu0 0.0
    %224 = vmatpush2.msra.mxu0 0.0
    %225 = vmatprep.subr.mxu0 0.0
    %226 = vmatpush2.msra.mxu0 0.0
    %227 = vmatprep.subr.mxu0 0.0
    %228 = vmatpush2.msra.mxu0 0.0
    %229 = vmatprep.subr.mxu0 0.0
    %230 = vmatpush2.msra.mxu0 0.0
    %231 = vmatprep.subr.mxu0 0.0
    %232 = vmatpush2.msra.mxu0 0.0
    %233 = vmatprep.subr.mxu0 0.0
    %234 = vmatpush2.msra.mxu0 0.0
    %235 = vmatprep.subr.mxu0 0.0
    %236 = vmatpush2.msra.mxu0 0.0
    %237 = vmatprep.subr.mxu0 0.0
    %238 = vmatpush2.msra.mxu0 0.0
    %239 = vmatprep.subr.mxu0 0.0
    %240 = vmatpush2.msra.mxu0 0.0
    %241 = vmatprep.subr.mxu0 0.0
    %242 = vmatpush2.msra.mxu0 0.0
    %243 = vmatprep.subr.mxu0 0.0
    %244 = vmatpush2.msra.mxu0 0.0
    %245 = vmatprep.subr.mxu0 0.0
    %246 = vmatpush2.msra.mxu0 0.0
    %247 = vmatprep.subr.mxu0 0.0
    %248 = vmatpush2.msra.mxu0 0.0
    %249 = vmatprep.subr.mxu0 0.0
    %250 = vmatpush2.msra.mxu0 0.0
    %251 = vmatprep.subr.mxu0 0.0
    %252 = vmatpush2.msra.mxu0 0.0
    %253 = vmatprep.mubr.f32.mxu0 0.0
    %254 = vmatmul.mubr.f32.gmra.mxu0 %v187
    %v255 = vpop.f32.mrf.mxu0
    %v256 = vadd.f32 %v184, %v255
    %v257 = vpop.f32.mrf.mxu0
    %258 = vdwg.mxu0
    %v259 = vld [vmem:[%s7] sm:$0x1]
    %v260 = vld [vmem:[%s8] sm:$0x1]
    %vm261 = vcmask 130048
    %v262 = vsel %vm261, %v256, 0.0
    %263 = vadd.xlane.f32.xlu0 %v262
    %v264 = vpop.xlane.xlu0 %263
    %v265 = vrcp.pop 16.0
    %v266 = vmul.f32 %v264, %v265
    %v267 = vmul.f32 %v256, %v256
    %v268 = vsel %vm261, %v267, 0.0
    %269 = vadd.xlane.f32.xlu0 %v268
    %v270 = vpop.xlane.xlu0 %269
    %v271 = vmul.f32 %v270, %v265
    %v272 = vmul.f32 %v266, %v266
    %v273 = vsub.f32 %v271, %v272
    %v274 = vmax.f32 %v273, 0.0
    %v275 = vsub.f32 %v256, %v266
    %v276 = vadd.f32 %v274, 1e-05
    %v277 = vrsqrt.pop %v276
    %v278 = vmul.f32 %v275, %v277
    %v280 = vlaneseq
    %v281 = vshrl.u32 %v280, 7
    %v282 = vsub.s32 0, %v281
    %v283 = vrot.slane %v259, %v282
    %v285 = vmul.f32 %v278, %v283
    %v287 = vlaneseq
    %v288 = vshrl.u32 %v287, 7
    %v289 = vsub.s32 0, %v288
    %v290 = vrot.slane %v260, %v289
    %v292 = vadd.f32 %v285, %v290
    %v293 = vmul.f32 %v292, 0.5
    %v294 = vmul.f32 %v292, 0.70710677
    %v295 = verf.f32.pop %v294
    %v296 = vadd.f32 %v295, 1.0
    %v297 = vmul.f32 %v293, %v296
    %v298 = vld [vmem:[%s9] sm:$0xff]
    %v299 = vld [vmem:[%s9 + $0x8] sm:$0xff]
    %v300 = vld [vmem:[%s10] sm:$0x1]
    %v302 = vlaneseq
    %v303 = vshrl.u32 %v302, 7
    %v304 = vsub.s32 0, %v303
    %v305 = vrot.slane %v300, %v304
    %v308 = vsel %vm261, %v297, 0
    %310 = vmatprep.subr.mxu0 0.0
    %311 = vmatpush1.msra.mxu0 0.0
    %312 = vmatprep.subr.mxu0 0.0
    %313 = vmatpush1.msra.mxu0 0.0
    %314 = vmatprep.subr.mxu0 0.0
    %315 = vmatpush1.msra.mxu0 0.0
    %316 = vmatprep.subr.mxu0 0.0
    %317 = vmatpush1.msra.mxu0 0.0
    %318 = vmatprep.subr.mxu0 0.0
    %319 = vmatpush1.msra.mxu0 0.0
    %320 = vmatprep.subr.mxu0 0.0
    %321 = vmatpush1.msra.mxu0 0.0
    %322 = vmatprep.subr.mxu0 0.0
    %323 = vmatpush1.msra.mxu0 0.0
    %324 = vmatprep.subr.mxu0 0.0
    %325 = vmatpush1.msra.mxu0 0.0
    %326 = vmatprep.subr.mxu0 0.0
    %327 = vmatpush1.msra.mxu0 0.0
    %328 = vmatprep.subr.mxu0 0.0
    %329 = vmatpush1.msra.mxu0 0.0
    %330 = vmatprep.subr.mxu0 0.0
    %331 = vmatpush1.msra.mxu0 0.0
    %332 = vmatprep.subr.mxu0 0.0
    %333 = vmatpush1.msra.mxu0 0.0
    %334 = vmatprep.subr.mxu0 0.0
    %335 = vmatpush1.msra.mxu0 0.0
    %336 = vmatprep.subr.mxu0 0.0
    %337 = vmatpush1.msra.mxu0 0.0
    %338 = vmatprep.subr.mxu0 0.0
    %339 = vmatpush1.msra.mxu0 %v299
    %340 = vmatprep.subr.mxu0 0.0
    %341 = vmatpush1.msra.mxu0 %v298
    %342 = vmatprep.subr.mxu0 0.0
    %343 = vmatpush2.msra.mxu0 0.0
    %344 = vmatprep.subr.mxu0 0.0
    %345 = vmatpush2.msra.mxu0 0.0
    %346 = vmatprep.subr.mxu0 0.0
    %347 = vmatpush2.msra.mxu0 0.0
    %348 = vmatprep.subr.mxu0 0.0
    %349 = vmatpush2.msra.mxu0 0.0
    %350 = vmatprep.subr.mxu0 0.0
    %351 = vmatpush2.msra.mxu0 0.0
    %352 = vmatprep.subr.mxu0 0.0
    %353 = vmatpush2.msra.mxu0 0.0
    %354 = vmatprep.subr.mxu0 0.0
    %355 = vmatpush2.msra.mxu0 0.0
    %356 = vmatprep.subr.mxu0 0.0
    %357 = vmatpush2.msra.mxu0 0.0
    %358 = vmatprep.subr.mxu0 0.0
    %359 = vmatpush2.msra.mxu0 0.0
    %360 = vmatprep.subr.mxu0 0.0
    %361 = vmatpush2.msra.mxu0 0.0
    %362 = vmatprep.subr.mxu0 0.0
    %363 = vmatpush2.msra.mxu0 0.0
    %364 = vmatprep.subr.mxu0 0.0
    %365 = vmatpush2.msra.mxu0 0.0
    %366 = vmatprep.subr.mxu0 0.0
    %367 = vmatpush2.msra.mxu0 0.0
    %368 = vmatprep.subr.mxu0 0.0
    %369 = vmatpush2.msra.mxu0 0.0
    %370 = vmatprep.subr.mxu0 0.0
    %371 = vmatpush2.msra.mxu0 0.0
    %372 = vmatprep.subr.mxu0 0.0
    %373 = vmatpush2.msra.mxu0 0.0
    %374 = vmatprep.mubr.f32.mxu0 0.0
    %375 = vmatmul.mubr.f32.gmra.mxu0 %v308
    %v376 = vpop.f32.mrf.mxu0
    %v377 = vadd.f32 %v305, %v376
    %v378 = vpop.f32.mrf.mxu0
    %379 = vdwg.mxu0
    %v380 = vmax.f32 %v377, -10.0
    %v381 = vmin.f32 %v380, 10.0
    %v382 = vmul.f32 %v381, 0.5
    %v383 = vmul.f32 %v382, 1.442695
    %v384 = vpow.pop %v383
    %v385 = vlaneseq
    %v386 = vand.u32 %v385, 127
    %vm387 = vcmp.lt.s32.totalorder %v386, 1
    %vm388 = vcmp.lt.s32.totalorder %v386, 2
    %vm389 = vcmp.lt.s32.totalorder %v386, 3
    %v390 = vsel %vm389, %v384, 0.0
    %v391 = vsel %vm388, %v381, %v390
    %v392 = vsel %vm387, %v377, %v391
    %393 = vst [vmem:[#allocation5] sm:$0xff] %v392
    // Predicated region
    $region50: #{tpu_custom_call.1} parent=1 // pred_check
      _
    $region51: #{tpu_custom_call.1} parent=1 // pred_check_branch
      %395 = sbr.rel (0) target = $region53
    $region52: #{tpu_custom_call.1} parent=1 // pred_region
      %s397 = ssub.s32 128, 128
      %398 = vsyncadd [#allocation4], %s397
      %s400 = sshll.u32 [#allocation5], 4
      %s401 = int_to_ptr.vmem [resolvable:$true] %s400
      %403 = dma.vmem_to_hbm [thread:$0]  %s401, 128, %s11, [#allocation4]
    $region53: #{tpu_custom_call.1} parent=1 // pred_fallthru
      _
    // Predicated region
    $region54: #{tpu_custom_call.1} parent=1 // pred_check
      _
    $region55: #{tpu_custom_call.1} parent=1 // pred_check_branch
      %405 = sbr.rel (0) target = $region57
    $region56: #{tpu_custom_call.1} parent=1 // pred_region
      %406 = dma.done [#allocation4], 128
    $region57: #{tpu_custom_call.1} parent=1 // pred_fallthru
      _
    %407 = vsyncpa [#allocation3], 1
    %408 = vsyncpa [#allocation4], 1

</llo_original>
